<compile_context>
chip_gen: v5e
topology: v5e:2x2
jax: 0.10.0
libtpu: 0.0.40
codegen_flags: <defaults>
</compile_context>

<pallas_src>
import functools
import math

import jax
import jax.numpy as jnp
from jax.experimental import pallas as pl
from jax.experimental.pallas import tpu as pltpu


def _lowrank_attn_kernel(x_ref, wqkv_ref, bqkv_ref, wu_ref, bu_ref, mask_ref,
                         out_ref, *, heads, head_size):
    """Fused LowRankAttention forward for one (bb, N, D) batch block.

    x_ref:    (bb, N, D)
    wqkv_ref: (D, 3R)   columns = [Wq.T | Wk.T | Wv.T]
    bqkv_ref: (1, 3R)
    wu_ref:   (R, D)    proj_up.weight.T
    bu_ref:   (1, D)
    mask_ref: (N, N)    additive mask
    out_ref:  (bb, N, D)
    """
    bb, n, d = x_ref.shape
    hs = head_size
    r = heads * hs
    scale = 1.0 / math.sqrt(hs)

    # ---- fused Q/K/V projection: one (bb*N, D) @ (D, 3R) MXU matmul --------
    x2 = x_ref[...].reshape(bb * n, d).astype(jnp.float32)
    qkv = jnp.dot(x2, wqkv_ref[...], preferred_element_type=jnp.float32)
    qkv = qkv + bqkv_ref[...].astype(jnp.float32)                # (bb*N, 3R)

    # ---- regroup per head & batch onto one leading batch axis (heads*bb) ----
    def split_heads(col0):
        parts = [qkv[:, col0 + h * hs: col0 + (h + 1) * hs].reshape(bb, n, hs)
                 for h in range(heads)]
        return jnp.concatenate(parts, axis=0)                    # (heads*bb, n, hs)

    q = split_heads(0)
    k = split_heads(r)
    v = split_heads(2 * r)

    # ---- attention, batched over heads*bb -----------------------------------
    att = jnp.einsum('bqd,bkd->bqk', q, k,
                     preferred_element_type=jnp.float32) * scale  # (heads*bb, n, n)
    att = att + mask_ref[...].astype(jnp.float32)[None, :, :]

    att_max = jnp.max(att, axis=-1, keepdims=True)
    p = jnp.exp(att - att_max)
    p = p / jnp.sum(p, axis=-1, keepdims=True)
    # TODO(synk): training-mode dropout on `p` not implemented (eval mode).

    y = jnp.einsum('bqk,bkd->bqd', p, v,
                   preferred_element_type=jnp.float32)            # (heads*bb, n, hs)

    # ---- reassemble (bb*N, R) and ONE output-projection matmul --------------
    y_cat = jnp.concatenate(
        [y[h * bb:(h + 1) * bb].reshape(bb * n, hs) for h in range(heads)],
        axis=-1)                                                  # (bb*N, R)
    out = jnp.dot(y_cat, wu_ref[...], preferred_element_type=jnp.float32)
    out = out + bu_ref[...].astype(jnp.float32)

    # single full-block store per grid step
    out_ref[...] = out.reshape(bb, n, d).astype(out_ref.dtype)


def _single_tensorcore_chip() -> bool:
    """True for single-TensorCore chips (v5e / v6e): collapse the batch grid
    there.  Multi-TC chips (v4/v5p/v7x) keep grid=(B,) parallel.  Perf-only
    heuristic; numerics are identical either way."""
    try:
        kind = jax.devices()[0].device_kind.lower()
    except Exception:
        return False
    return any(t in kind for t in
               ("v5e", "v5 lite", "v5lite", "v6e", "v6 lite", "v6lite"))


def low_rank_attention(x, params, mask=None, *, heads, batch_block=None):
    """x: (B, N, D) float32.  params: dict of PyTorch-layout weights/biases."""
    B, N, D = x.shape
    R = params["wq"].shape[0]
    assert R % heads == 0
    hs = R // heads
    if mask is None:
        mask = jnp.zeros((N, N), dtype=jnp.float32)

    # Wrapper-side one-time relayout to MXU-native, fused orientations:
    #   Wqkv: (D, 3R) = [Wq.T | Wk.T | Wv.T],   Wu: (R, D) = proj_up.weight.T
    wqkv = jnp.concatenate(
        [params["wq"].T, params["wk"].T, params["wv"].T], axis=1)       # (D, 3R)
    bqkv = jnp.concatenate(
        [params["bq"], params["bk"], params["bv"]]).reshape(1, 3 * R)   # (1, 3R)
    wu = params["wu"].T                                                  # (R, D)
    bu = params["bu"].reshape(1, D)                                      # (1, D)

    if batch_block is None:
        batch_block = B if _single_tensorcore_chip() else 1
    assert B % batch_block == 0
    grid = (B // batch_block,)

    full = lambda shp: pl.BlockSpec(shp, lambda i: (0,) * len(shp))

    kernel = functools.partial(_lowrank_attn_kernel, heads=heads, head_size=hs)
    return pl.pallas_call(
        kernel,
        out_shape=jax.ShapeDtypeStruct((B, N, D), x.dtype),
        grid=grid,
        in_specs=[
            pl.BlockSpec((batch_block, N, D), lambda i: (i, 0, 0)),  # x
            full((D, 3 * R)), full((1, 3 * R)),                      # Wqkv, bqkv
            full((R, D)), full((1, D)),                              # Wup,  bup
            full((N, N)),                                            # mask
        ],
        out_specs=pl.BlockSpec((batch_block, N, D), lambda i: (i, 0, 0)),
        compiler_params=pltpu.CompilerParams(
            dimension_semantics=("parallel",),
            vmem_limit_bytes=32 * 1024 * 1024),
    )(x, wqkv, bqkv, wu, bu, mask)


def _reference(x, params, mask, heads):
    """Pure-JAX replica of the PyTorch forward (eval mode), highest precision."""
    B, N, D = x.shape
    R = params["wq"].shape[0]
    hs = R // heads
    hp = jax.lax.Precision.HIGHEST
    q = jnp.dot(x, params["wq"].T, precision=hp) + params["bq"]
    k = jnp.dot(x, params["wk"].T, precision=hp) + params["bk"]
    v = jnp.dot(x, params["wv"].T, precision=hp) + params["bv"]

    def split(t):  # (B,N,R) -> (B*H, N, hs)
        return t.reshape(B, N, heads, hs).transpose(0, 2, 1, 3).reshape(B * heads, N, hs)

    q, k, v = split(q), split(k), split(v)
    att = jnp.einsum("bnh,bmh->bnm", q, k, precision=hp) / math.sqrt(hs)
    if mask is not None:
        att = att + mask[None, :, :]
    att = jax.nn.softmax(att, axis=-1)
    y = jnp.einsum("bnm,bmh->bnh", att, v, precision=hp)
    y = y.reshape(B, heads, N, hs).transpose(0, 2, 1, 3).reshape(B, N, R)
    return jnp.dot(y, params["wu"].T, precision=hp) + params["bu"]


def _init_params(key, dimension, rank):
    """Deterministic PyTorch-style uniform(-1/sqrt(fan_in), 1/sqrt(fan_in)) init."""
    ks = jax.random.split(key, 8)

    def lin(kw, kb, out_f, in_f):
        bound = 1.0 / math.sqrt(in_f)
        w = jax.random.uniform(kw, (out_f, in_f), jnp.float32, -bound, bound)
        b = jax.random.uniform(kb, (out_f,), jnp.float32, -bound, bound)
        return w, b

    wq, bq = lin(ks[0], ks[1], rank, dimension)
    wk, bk = lin(ks[2], ks[3], rank, dimension)
    wv, bv = lin(ks[4], ks[5], rank, dimension)
    wu, bu = lin(ks[6], ks[7], dimension, rank)
    return dict(wq=wq, bq=bq, wk=wk, bk=bk, wv=wv, bv=bv, wu=wu, bu=bu)


if __name__ == "__main__":
    # config: dimension=64, rank=32, heads=4 (head_size=8), dropout eval-mode.
    B, N, D, R, H = 2, 16, 64, 32, 4

    key = jax.random.PRNGKey(0)
    k_x, k_p = jax.random.split(key)
    x = jax.random.normal(k_x, (B, N, D), dtype=jnp.float32)
    params = _init_params(k_p, D, R)

    # causal additive mask (same convention as the PyTorch module: added to logits)
    causal = jnp.where(jnp.tril(jnp.ones((N, N), dtype=bool)),
                       0.0, -1e9).astype(jnp.float32)

    out = low_rank_attention(x, params, mask=causal, heads=H)
    out = jax.block_until_ready(out)

    ref = _reference(x, params, causal, H)
    assert out.shape == (B, N, D)
    assert jnp.allclose(out, ref, atol=1e-4, rtol=1e-4), "mismatch vs reference"

    print("KERNEL_OK")
</pallas_src>

<mosaic_0001>
module attributes {stable_mosaic.version = 11 : i64} {
  func.func @_lowrank_attn_kernel(%arg0: i32, %arg1: memref<1x16x64xf32, #tpu.memory_space<vmem>>, %arg2: memref<64x96xf32, #tpu.memory_space<vmem>>, %arg3: memref<1x96xf32, #tpu.memory_space<vmem>>, %arg4: memref<32x64xf32, #tpu.memory_space<vmem>>, %arg5: memref<1x64xf32, #tpu.memory_space<vmem>>, %arg6: memref<16x16xf32, #tpu.memory_space<vmem>>, %arg7: memref<1x16x64xf32, #tpu.memory_space<vmem>>) attributes {dimension_semantics = [#tpu.dimension_semantics<parallel>], iteration_bounds = array<i64: 2>, scalar_prefetch = 0 : i64, scratch_operands = 0 : i64, tpu.core_type = #tpu.core_type<tc>, window_params = [{transform_indices = @transform_0, window_bounds = array<i64: 1, 16, 64>}, {pipeline_mode = #tpu.pipeline_mode<synchronous>, transform_indices = @transform_1, window_bounds = array<i64: 64, 96>}, {pipeline_mode = #tpu.pipeline_mode<synchronous>, transform_indices = @transform_2, window_bounds = array<i64: 1, 96>}, {pipeline_mode = #tpu.pipeline_mode<synchronous>, transform_indices = @transform_3, window_bounds = array<i64: 32, 64>}, {pipeline_mode = #tpu.pipeline_mode<synchronous>, transform_indices = @transform_4, window_bounds = array<i64: 1, 64>}, {pipeline_mode = #tpu.pipeline_mode<synchronous>, transform_indices = @transform_5, window_bounds = array<i64: 16, 16>}, {transform_indices = @transform_6, window_bounds = array<i64: 1, 16, 64>}]} {
    %c0 = arith.constant 0 : index
    %c0_0 = arith.constant 0 : index
    %c0_1 = arith.constant 0 : index
    %0 = vector.load %arg1[%c0, %c0_0, %c0_1] : memref<1x16x64xf32, #tpu.memory_space<vmem>>, vector<1x16x64xf32>
    %1 = vector.shape_cast %0 : vector<1x16x64xf32> to vector<16x64xf32>
    %c0_2 = arith.constant 0 : index
    %c0_3 = arith.constant 0 : index
    %2 = vector.load %arg2[%c0_2, %c0_3] : memref<64x96xf32, #tpu.memory_space<vmem>>, vector<64x96xf32>
    %cst = arith.constant dense<0.000000e+00> : vector<16x96xf32>
    %3 = tpu.matmul %1, %2, %cst {dimension_numbers = #tpu.dot_dimension_numbers<[1], [0], [0], [1], [0, 0, 1, 1], [], []>} : vector<16x64xf32>, vector<64x96xf32>, vector<16x96xf32> -> vector<16x96xf32>
    %c0_4 = arith.constant 0 : index
    %c0_5 = arith.constant 0 : index
    %4 = vector.load %arg3[%c0_4, %c0_5] : memref<1x96xf32, #tpu.memory_space<vmem>>, vector<1x96xf32>
    %5 = vector.broadcast %4 : vector<1x96xf32> to vector<16x96xf32>
    %6 = arith.addf %3, %5 : vector<16x96xf32>
    %7 = vector.extract_strided_slice %6 {offsets = [0, 0], sizes = [16, 8], strides = [1, 1]} : vector<16x96xf32> to vector<16x8xf32>
    %8 = vector.shape_cast %7 : vector<16x8xf32> to vector<1x16x8xf32>
    %9 = vector.extract_strided_slice %6 {offsets = [0, 8], sizes = [16, 8], strides = [1, 1]} : vector<16x96xf32> to vector<16x8xf32>
    %10 = vector.shape_cast %9 : vector<16x8xf32> to vector<1x16x8xf32>
    %11 = vector.extract_strided_slice %6 {offsets = [0, 16], sizes = [16, 8], strides = [1, 1]} : vector<16x96xf32> to vector<16x8xf32>
    %12 = vector.shape_cast %11 : vector<16x8xf32> to vector<1x16x8xf32>
    %13 = vector.extract_strided_slice %6 {offsets = [0, 24], sizes = [16, 8], strides = [1, 1]} : vector<16x96xf32> to vector<16x8xf32>
    %14 = vector.shape_cast %13 : vector<16x8xf32> to vector<1x16x8xf32>
    %15 = tpu.concatenate %8, %10, %12, %14 in 0 : vector<1x16x8xf32>, vector<1x16x8xf32>, vector<1x16x8xf32>, vector<1x16x8xf32> -> vector<4x16x8xf32>
    %16 = vector.extract_strided_slice %6 {offsets = [0, 32], sizes = [16, 8], strides = [1, 1]} : vector<16x96xf32> to vector<16x8xf32>
    %17 = vector.shape_cast %16 : vector<16x8xf32> to vector<1x16x8xf32>
    %18 = vector.extract_strided_slice %6 {offsets = [0, 40], sizes = [16, 8], strides = [1, 1]} : vector<16x96xf32> to vector<16x8xf32>
    %19 = vector.shape_cast %18 : vector<16x8xf32> to vector<1x16x8xf32>
    %20 = vector.extract_strided_slice %6 {offsets = [0, 48], sizes = [16, 8], strides = [1, 1]} : vector<16x96xf32> to vector<16x8xf32>
    %21 = vector.shape_cast %20 : vector<16x8xf32> to vector<1x16x8xf32>
    %22 = vector.extract_strided_slice %6 {offsets = [0, 56], sizes = [16, 8], strides = [1, 1]} : vector<16x96xf32> to vector<16x8xf32>
    %23 = vector.shape_cast %22 : vector<16x8xf32> to vector<1x16x8xf32>
    %24 = tpu.concatenate %17, %19, %21, %23 in 0 : vector<1x16x8xf32>, vector<1x16x8xf32>, vector<1x16x8xf32>, vector<1x16x8xf32> -> vector<4x16x8xf32>
    %25 = vector.extract_strided_slice %6 {offsets = [0, 64], sizes = [16, 8], strides = [1, 1]} : vector<16x96xf32> to vector<16x8xf32>
    %26 = vector.shape_cast %25 : vector<16x8xf32> to vector<1x16x8xf32>
    %27 = vector.extract_strided_slice %6 {offsets = [0, 72], sizes = [16, 8], strides = [1, 1]} : vector<16x96xf32> to vector<16x8xf32>
    %28 = vector.shape_cast %27 : vector<16x8xf32> to vector<1x16x8xf32>
    %29 = vector.extract_strided_slice %6 {offsets = [0, 80], sizes = [16, 8], strides = [1, 1]} : vector<16x96xf32> to vector<16x8xf32>
    %30 = vector.shape_cast %29 : vector<16x8xf32> to vector<1x16x8xf32>
    %31 = vector.extract_strided_slice %6 {offsets = [0, 88], sizes = [16, 8], strides = [1, 1]} : vector<16x96xf32> to vector<16x8xf32>
    %32 = vector.shape_cast %31 : vector<16x8xf32> to vector<1x16x8xf32>
    %33 = tpu.concatenate %26, %28, %30, %32 in 0 : vector<1x16x8xf32>, vector<1x16x8xf32>, vector<1x16x8xf32>, vector<1x16x8xf32> -> vector<4x16x8xf32>
    "tpu.trace_start"() <{level = 10 : i32, message = "bqd,bkd->bqk"}> : () -> ()
    %cst_6 = arith.constant dense<0.000000e+00> : vector<4x16x16xf32>
    %34 = tpu.matmul %15, %24, %cst_6 {dimension_numbers = #tpu.dot_dimension_numbers<[2], [2], [1], [1], [0, 0, 0, 1, 1, 1], [0], [0]>} : vector<4x16x8xf32>, vector<4x16x8xf32>, vector<4x16x16xf32> -> vector<4x16x16xf32>
    "tpu.trace_stop"() : () -> ()
    %cst_7 = arith.constant 0.353553385 : f32
    %35 = vector.broadcast %cst_7 : f32 to vector<4x16x16xf32>
    %36 = arith.mulf %34, %35 : vector<4x16x16xf32>
    %c0_8 = arith.constant 0 : index
    %c0_9 = arith.constant 0 : index
    %37 = vector.load %arg6[%c0_8, %c0_9] : memref<16x16xf32, #tpu.memory_space<vmem>>, vector<16x16xf32>
    %38 = vector.shape_cast %37 : vector<16x16xf32> to vector<1x16x16xf32>
    %39 = vector.broadcast %38 : vector<1x16x16xf32> to vector<4x16x16xf32>
    %40 = arith.addf %36, %39 : vector<4x16x16xf32>
    %cst_10 = arith.constant dense<0xFF800000> : vector<4x16xf32>
    %41 = vector.multi_reduction <maximumf>, %40, %cst_10 [2] : vector<4x16x16xf32> to vector<4x16xf32>
    %42 = vector.shape_cast %41 : vector<4x16xf32> to vector<4x16x1xf32>
    %43 = vector.broadcast %42 : vector<4x16x1xf32> to vector<4x16x16xf32>
    %44 = arith.subf %40, %43 : vector<4x16x16xf32>
    %45 = math.exp %44 : vector<4x16x16xf32>
    %cst_11 = arith.constant dense<0.000000e+00> : vector<4x16xf32>
    %46 = vector.multi_reduction <add>, %45, %cst_11 [2] : vector<4x16x16xf32> to vector<4x16xf32>
    %47 = vector.shape_cast %46 : vector<4x16xf32> to vector<4x16x1xf32>
    %48 = vector.broadcast %47 : vector<4x16x1xf32> to vector<4x16x16xf32>
    %49 = arith.divf %45, %48 : vector<4x16x16xf32>
    "tpu.trace_start"() <{level = 10 : i32, message = "bqk,bkd->bqd"}> : () -> ()
    %cst_12 = arith.constant dense<0.000000e+00> : vector<4x16x8xf32>
    %50 = tpu.matmul %49, %33, %cst_12 {dimension_numbers = #tpu.dot_dimension_numbers<[2], [1], [1], [2], [0, 0, 0, 1, 1, 2], [0], [0]>} : vector<4x16x16xf32>, vector<4x16x8xf32>, vector<4x16x8xf32> -> vector<4x16x8xf32>
    "tpu.trace_stop"() : () -> ()
    %51 = vector.extract_strided_slice %50 {offsets = [0, 0, 0], sizes = [1, 16, 8], strides = [1, 1, 1]} : vector<4x16x8xf32> to vector<1x16x8xf32>
    %52 = vector.shape_cast %51 : vector<1x16x8xf32> to vector<16x8xf32>
    %53 = vector.extract_strided_slice %50 {offsets = [1, 0, 0], sizes = [1, 16, 8], strides = [1, 1, 1]} : vector<4x16x8xf32> to vector<1x16x8xf32>
    %54 = vector.shape_cast %53 : vector<1x16x8xf32> to vector<16x8xf32>
    %55 = vector.extract_strided_slice %50 {offsets = [2, 0, 0], sizes = [1, 16, 8], strides = [1, 1, 1]} : vector<4x16x8xf32> to vector<1x16x8xf32>
    %56 = vector.shape_cast %55 : vector<1x16x8xf32> to vector<16x8xf32>
    %57 = vector.extract_strided_slice %50 {offsets = [3, 0, 0], sizes = [1, 16, 8], strides = [1, 1, 1]} : vector<4x16x8xf32> to vector<1x16x8xf32>
    %58 = vector.shape_cast %57 : vector<1x16x8xf32> to vector<16x8xf32>
    %59 = tpu.concatenate %52, %54, %56, %58 in 1 : vector<16x8xf32>, vector<16x8xf32>, vector<16x8xf32>, vector<16x8xf32> -> vector<16x32xf32>
    %c0_13 = arith.constant 0 : index
    %c0_14 = arith.constant 0 : index
    %60 = vector.load %arg4[%c0_13, %c0_14] : memref<32x64xf32, #tpu.memory_space<vmem>>, vector<32x64xf32>
    %cst_15 = arith.constant dense<0.000000e+00> : vector<16x64xf32>
    %61 = tpu.matmul %59, %60, %cst_15 {dimension_numbers = #tpu.dot_dimension_numbers<[1], [0], [0], [1], [0, 0, 1, 1], [], []>} : vector<16x32xf32>, vector<32x64xf32>, vector<16x64xf32> -> vector<16x64xf32>
    %c0_16 = arith.constant 0 : index
    %c0_17 = arith.constant 0 : index
    %62 = vector.load %arg5[%c0_16, %c0_17] : memref<1x64xf32, #tpu.memory_space<vmem>>, vector<1x64xf32>
    %63 = vector.broadcast %62 : vector<1x64xf32> to vector<16x64xf32>
    %64 = arith.addf %61, %63 : vector<16x64xf32>
    %65 = vector.shape_cast %64 : vector<16x64xf32> to vector<1x16x64xf32>
    %c0_18 = arith.constant 0 : index
    %c0_19 = arith.constant 0 : index
    %c0_20 = arith.constant 0 : index
    %66 = vector.load %arg7[%c0_18, %c0_19, %c0_20] : memref<1x16x64xf32, #tpu.memory_space<vmem>>, vector<1x16x64xf32>
    tpu.vector_store %arg7[%c0_18, %c0_19, %c0_20], %65 {strides = array<i32>} : memref<1x16x64xf32, #tpu.memory_space<vmem>>, vector<1x16x64xf32>,
    return
  }
  func.func @transform_0(%arg0: i32) -> (i32, i32, i32) {
    %c0_i32 = arith.constant 0 : i32
    %c0_i32_0 = arith.constant 0 : i32
    %c0_i32_1 = arith.constant 0 : i32
    return %arg0, %c0_i32, %c0_i32_0 : i32, i32, i32
  }
  func.func @transform_1(%arg0: i32) -> (i32, i32) {
    %c0_i32 = arith.constant 0 : i32
    %c0_i32_0 = arith.constant 0 : i32
    %c0_i32_1 = arith.constant 0 : i32
    return %c0_i32, %c0_i32_0 : i32, i32
  }
  func.func @transform_2(%arg0: i32) -> (i32, i32) {
    %c0_i32 = arith.constant 0 : i32
    %c0_i32_0 = arith.constant 0 : i32
    %c0_i32_1 = arith.constant 0 : i32
    return %c0_i32, %c0_i32_0 : i32, i32
  }
  func.func @transform_3(%arg0: i32) -> (i32, i32) {
    %c0_i32 = arith.constant 0 : i32
    %c0_i32_0 = arith.constant 0 : i32
    %c0_i32_1 = arith.constant 0 : i32
    return %c0_i32, %c0_i32_0 : i32, i32
  }
  func.func @transform_4(%arg0: i32) -> (i32, i32) {
    %c0_i32 = arith.constant 0 : i32
    %c0_i32_0 = arith.constant 0 : i32
    %c0_i32_1 = arith.constant 0 : i32
    return %c0_i32, %c0_i32_0 : i32, i32
  }
  func.func @transform_5(%arg0: i32) -> (i32, i32) {
    %c0_i32 = arith.constant 0 : i32
    %c0_i32_0 = arith.constant 0 : i32
    %c0_i32_1 = arith.constant 0 : i32
    return %c0_i32, %c0_i32_0 : i32, i32
  }
  func.func @transform_6(%arg0: i32) -> (i32, i32, i32) {
    %c0_i32 = arith.constant 0 : i32
    %c0_i32_0 = arith.constant 0 : i32
    %c0_i32_1 = arith.constant 0 : i32
    return %arg0, %c0_i32, %c0_i32_0 : i32, i32, i32
  }
}

</mosaic_0001>

<llo_original>
// kernel: tpu_custom_call.1
$region0: #{tpu_custom_call.1}
  #allocation0 [shape = 'u32[]', space=smem, size = 0x4, offset = 0x4, fixed_abs, tag = 'smem constant byte address 0x4 - core index']
  #allocation1 [shape = 'u32[72,128]{1,0:T(1,128)}', space=vmem, size = 0x9000, scoped, tag = 'internal scratch']
  %s0 = inlined_call_operand.hbm [shape: f32[2,16,64], index: 0, kind: input, shape index: {}]
  %s1 = inlined_call_operand.hbm [shape: f32[64,96], index: 1, kind: input, shape index: {}]
  %s2 = inlined_call_operand.vmem [shape: f32[1,96], index: 2, kind: input, shape index: {}]
  %s3 = inlined_call_operand.hbm [shape: f32[32,64], index: 3, kind: input, shape index: {}]
  %s4 = inlined_call_operand.vmem [shape: f32[1,64], index: 4, kind: input, shape index: {}]
  %s5 = inlined_call_operand.hbm [shape: f32[16,16], index: 5, kind: input, shape index: {}]
  %s6 = inlined_call_operand.hbm [shape: f32[2,16,64], index: 6, kind: output, shape index: {}]
  %s7 = sld [smem:[#allocation0]]
  $region73: #{tpu_custom_call.1} parent=0
    _
  %s9 = ssub.s32 1, %s7
  %s10 = scalar_select 0, %s9, %s7
  $region1: #{tpu_custom_call.1} parent=0
    #allocation2 [shape = 'u8[16384]{0}', space=vmem, size = 0x4000, scoped, tag = 'input window, operand 0']
    #allocation3 [shape = 's32[2]{0}', space=sflag, size = 0x8, scoped, tag = 'scoped memory for tpu_custom_call.1']
    #allocation4 [shape = 's32[2]{0}', space=sflag, size = 0x8, scoped, tag = 'scoped memory for tpu_custom_call.1']
    #allocation5 [shape = 'u8[32768]{0}', space=vmem, size = 0x8000, scoped, tag = 'input window, operand 1, single buffered']
    #allocation6 [shape = 's32[1]{0}', space=sflag, size = 0x4, scoped, tag = 'scoped memory for tpu_custom_call.1']
    #allocation7 [shape = 'u8[16384]{0}', space=vmem, size = 0x4000, scoped, tag = 'input window, operand 3, single buffered']
    #allocation8 [shape = 'u8[8192]{0}', space=vmem, size = 0x2000, scoped, tag = 'input window, operand 5, single buffered']
    #allocation9 [shape = 's32[1]{0}', space=sflag, size = 0x4, scoped, tag = 'scoped memory for tpu_custom_call.1']
    #allocation10 [shape = 'u8[16384]{0}', space=vmem, size = 0x4000, scoped, tag = 'output window, operand 0']
    %11 = vsyncpa [#allocation3], 0
    %s12 = scalar_lea.sflag [#allocation3], 1
    %13 = vsyncpa %s12, 0
    %14 = vsyncpa [#allocation6], 0
    %15 = vsyncpa [#allocation9], 0
    %16 = vsyncpa [#allocation4], 0
    %s17 = scalar_lea.sflag [#allocation4], 1
    %18 = vsyncpa %s17, 0
    loop: start=0, step=1, limit=4
    $region2: #{tpu_custom_call.1} parent=1 // loop_pre_header
      _
    $region3: #{tpu_custom_call.1} parent=1 // loop_header
      %s20 = sphi 0, %s24
      %p21 = scmp.ge.s32.totalorder %s20, 4
      %s30 = sphi 0, %s32
      %s33 = sphi 0, %s30
      %s34 = sphi 0, %s33
      %s50 = sphi 0, %s34
      %s54 = sphi 0, %s54
      %s56 = sphi 0, %s54
      %s57 = sphi 0, %s56
      %s71 = sphi 0, %s57
      %s75 = sphi 0, %s75
      %s77 = sphi 0, %s75
      %s78 = sphi 0, %s77
      %s92 = sphi 0, %s78
      %s96 = sphi 0, %s96
      %s98 = sphi 0, %s96
      %s99 = sphi 0, %s98
      %s113 = sphi 0, %s99
      %s117 = sphi 0, %s117
      %s119 = sphi 0, %s117
      %s120 = sphi 0, %s119
      %s134 = sphi 0, %s120
      %s138 = sphi 0, %s138
      %s140 = sphi 0, %s138
      %s141 = sphi 0, %s140
      %s155 = sphi 0, %s141
      %s161 = sphi 0, %s163
      %s164 = sphi 0, %s161
      %s165 = sphi 0, %s164
      %s181 = sphi 0, %s165
    $region4: #{tpu_custom_call.1} parent=1 // loop_header_branch
      %23 = sbr.rel (%p21) target = $region8
    $region5: #{tpu_custom_call.1} parent=1 // loop_body
      %s25 = ssub.s32 %s20, 1
      %s26 = ssub.s32 %s20, 2
      %s27 = sadd.s32 %s20, 1
      %s28 = ssub.s32 %s20, %s27
      %p29 = scmp.eq.s32.totalorder %s28, 0
      %s31 = sadd.s32 %s30, 1
      %s32 = scalar_select %p29, %s30, %s31
      %p35 = pneg %p29
      %p36 = scmp.eq.s32.totalorder %s20, 1
      %p37 = por %p35, %p36
      %p38 = scmp.ne.s32.totalorder %s30, %s33
      %p39 = scmp.eq.s32.totalorder %s20, 0
      %p40 = por %p38, %p39
      %p41 = scmp.ne.s32.totalorder %s30, %s33
      %p42 = scmp.eq.s32.totalorder %s25, 1
      %p43 = por %p41, %p42
      %p44 = scmp.ne.s32.totalorder %s33, %s34
      %p45 = scmp.eq.s32.totalorder %s25, 0
      %p46 = por %p44, %p45
      %p47 = scmp.ne.s32.totalorder %s33, %s34
      %p48 = scmp.eq.s32.totalorder %s26, 1
      %p49 = por %p47, %p48
      %p51 = scmp.ne.s32.totalorder %s34, %s50
      %p52 = scmp.eq.s32.totalorder %s26, 0
      %p53 = por %p51, %p52
      %s55 = sadd.s32 %s54, 1
      %p58 = scmp.eq.s32.totalorder %s20, 1
      %p59 = scmp.ne.s32.totalorder %s54, %s56
      %p60 = scmp.eq.s32.totalorder %s20, 0
      %p61 = por %p59, %p60
      %p62 = scmp.ne.s32.totalorder %s54, %s56
      %p63 = scmp.eq.s32.totalorder %s25, 1
      %p64 = por %p62, %p63
      %p65 = scmp.ne.s32.totalorder %s56, %s57
      %p66 = scmp.eq.s32.totalorder %s25, 0
      %p67 = por %p65, %p66
      %p68 = scmp.ne.s32.totalorder %s56, %s57
      %p69 = scmp.eq.s32.totalorder %s26, 1
      %p70 = por %p68, %p69
      %p72 = scmp.ne.s32.totalorder %s57, %s71
      %p73 = scmp.eq.s32.totalorder %s26, 0
      %p74 = por %p72, %p73
      %s76 = sadd.s32 %s75, 1
      %p79 = scmp.eq.s32.totalorder %s20, 1
      %p80 = scmp.ne.s32.totalorder %s75, %s77
      %p81 = scmp.eq.s32.totalorder %s20, 0
      %p82 = por %p80, %p81
      %p83 = scmp.ne.s32.totalorder %s75, %s77
      %p84 = scmp.eq.s32.totalorder %s25, 1
      %p85 = por %p83, %p84
      %p86 = scmp.ne.s32.totalorder %s77, %s78
      %p87 = scmp.eq.s32.totalorder %s25, 0
      %p88 = por %p86, %p87
      %p89 = scmp.ne.s32.totalorder %s77, %s78
      %p90 = scmp.eq.s32.totalorder %s26, 1
      %p91 = por %p89, %p90
      %p93 = scmp.ne.s32.totalorder %s78, %s92
      %p94 = scmp.eq.s32.totalorder %s26, 0
      %p95 = por %p93, %p94
      %s97 = sadd.s32 %s96, 1
      %p100 = scmp.eq.s32.totalorder %s20, 1
      %p101 = scmp.ne.s32.totalorder %s96, %s98
      %p102 = scmp.eq.s32.totalorder %s20, 0
      %p103 = por %p101, %p102
      %p104 = scmp.ne.s32.totalorder %s96, %s98
      %p105 = scmp.eq.s32.totalorder %s25, 1
      %p106 = por %p104, %p105
      %p107 = scmp.ne.s32.totalorder %s98, %s99
      %p108 = scmp.eq.s32.totalorder %s25, 0
      %p109 = por %p107, %p108
      %p110 = scmp.ne.s32.totalorder %s98, %s99
      %p111 = scmp.eq.s32.totalorder %s26, 1
      %p112 = por %p110, %p111
      %p114 = scmp.ne.s32.totalorder %s99, %s113
      %p115 = scmp.eq.s32.totalorder %s26, 0
      %p116 = por %p114, %p115
      %s118 = sadd.s32 %s117, 1
      %p121 = scmp.eq.s32.totalorder %s20, 1
      %p122 = scmp.ne.s32.totalorder %s117, %s119
      %p123 = scmp.eq.s32.totalorder %s20, 0
      %p124 = por %p122, %p123
      %p125 = scmp.ne.s32.totalorder %s117, %s119
      %p126 = scmp.eq.s32.totalorder %s25, 1
      %p127 = por %p125, %p126
      %p128 = scmp.ne.s32.totalorder %s119, %s120
      %p129 = scmp.eq.s32.totalorder %s25, 0
      %p130 = por %p128, %p129
      %p131 = scmp.ne.s32.totalorder %s119, %s120
      %p132 = scmp.eq.s32.totalorder %s26, 1
      %p133 = por %p131, %p132
      %p135 = scmp.ne.s32.totalorder %s120, %s134
      %p136 = scmp.eq.s32.totalorder %s26, 0
      %p137 = por %p135, %p136
      %s139 = sadd.s32 %s138, 1
      %p142 = scmp.eq.s32.totalorder %s20, 1
      %p143 = scmp.ne.s32.totalorder %s138, %s140
      %p144 = scmp.eq.s32.totalorder %s20, 0
      %p145 = por %p143, %p144
      %p146 = scmp.ne.s32.totalorder %s138, %s140
      %p147 = scmp.eq.s32.totalorder %s25, 1
      %p148 = por %p146, %p147
      %p149 = scmp.ne.s32.totalorder %s140, %s141
      %p150 = scmp.eq.s32.totalorder %s25, 0
      %p151 = por %p149, %p150
      %p152 = scmp.ne.s32.totalorder %s140, %s141
      %p153 = scmp.eq.s32.totalorder %s26, 1
      %p154 = por %p152, %p153
      %p156 = scmp.ne.s32.totalorder %s141, %s155
      %p157 = scmp.eq.s32.totalorder %s26, 0
      %p158 = por %p156, %p157
      %s159 = ssub.s32 %s20, %s27
      %p160 = scmp.eq.s32.totalorder %s159, 0
      %s162 = sadd.s32 %s161, 1
      %s163 = scalar_select %p160, %s161, %s162
      %p166 = pneg %p160
      %p167 = scmp.eq.s32.totalorder %s20, 1
      %p168 = por %p166, %p167
      %p169 = scmp.ne.s32.totalorder %s161, %s164
      %p170 = scmp.eq.s32.totalorder %s20, 0
      %p171 = por %p169, %p170
      %p172 = scmp.ne.s32.totalorder %s161, %s164
      %p173 = scmp.eq.s32.totalorder %s25, 1
      %p174 = por %p172, %p173
      %p175 = scmp.ne.s32.totalorder %s164, %s165
      %p176 = scmp.eq.s32.totalorder %s25, 0
      %p177 = por %p175, %p176
      %p178 = scmp.ne.s32.totalorder %s164, %s165
      %p179 = scmp.eq.s32.totalorder %s26, 1
      %p180 = por %p178, %p179
      %p182 = scmp.ne.s32.totalorder %s165, %s181
      %p183 = scmp.eq.s32.totalorder %s26, 0
      %p184 = por %p182, %p183
      %p185 = scmp.le.s32.totalorder 1, %s20
      %p186 = scmp.lt.s32.totalorder %s20, 3
      %p187 = pnand %p185, %p186
      %p188 = pneg %p187
      // Predicated region
      $region9: #{tpu_custom_call.1} parent=5 // pred_check
        _
      $region10: #{tpu_custom_call.1} parent=5 // pred_check_branch
        %190 = sbr.rel (%p187) target = $region12
      $region11: #{tpu_custom_call.1} parent=5 // pred_region
        %s191 = ssub.s32 %s20, 1
        // Predicated region
        $region13: #{tpu_custom_call.1} parent=11 // pred_check
          %p192 = pneg %p67
        $region14: #{tpu_custom_call.1} parent=11 // pred_check_branch
          %194 = sbr.rel (%p192) target = $region16
        $region15: #{tpu_custom_call.1} parent=11 // pred_region
          %196 = vsyncadd [#allocation6], 0
          %s197 = sshll.u32 %s1, 4
          %s198 = int_to_ptr.hbm [resolvable:$true] %s197
          %s199 = sshll.u32 [#allocation5], 4
          %s200 = int_to_ptr.vmem [resolvable:$true] %s199
          %205 = dma.hbm_to_vmem [thread:$0]  %s198, 1024, %s200, [#allocation6], 128, 128, 8
        $region16: #{tpu_custom_call.1} parent=11 // pred_fallthru
          _
        // Predicated region
        $region17: #{tpu_custom_call.1} parent=11 // pred_check
          %p206 = pneg %p88
        $region18: #{tpu_custom_call.1} parent=11 // pred_check_branch
          %208 = sbr.rel (%p206) target = $region20
        $region19: #{tpu_custom_call.1} parent=11 // pred_region
          _
        $region20: #{tpu_custom_call.1} parent=11 // pred_fallthru
          _
        // Predicated region
        $region21: #{tpu_custom_call.1} parent=11 // pred_check
          %p209 = pneg %p109
        $region22: #{tpu_custom_call.1} parent=11 // pred_check_branch
          %211 = sbr.rel (%p209) target = $region24
        $region23: #{tpu_custom_call.1} parent=11 // pred_region
          %213 = vsyncadd [#allocation6], 0
          %s214 = sshll.u32 %s3, 4
          %s215 = int_to_ptr.hbm [resolvable:$true] %s214
          %s216 = sshll.u32 [#allocation7], 4
          %s217 = int_to_ptr.vmem [resolvable:$true] %s216
          %222 = dma.hbm_to_vmem [thread:$0]  %s215, 512, %s217, [#allocation6], 128, 128, 8
        $region24: #{tpu_custom_call.1} parent=11 // pred_fallthru
          _
        // Predicated region
        $region25: #{tpu_custom_call.1} parent=11 // pred_check
          %p223 = pneg %p130
        $region26: #{tpu_custom_call.1} parent=11 // pred_check_branch
          %225 = sbr.rel (%p223) target = $region28
        $region27: #{tpu_custom_call.1} parent=11 // pred_region
          _
        $region28: #{tpu_custom_call.1} parent=11 // pred_fallthru
          _
        // Predicated region
        $region29: #{tpu_custom_call.1} parent=11 // pred_check
          %p226 = pneg %p151
        $region30: #{tpu_custom_call.1} parent=11 // pred_check_branch
          %228 = sbr.rel (%p226) target = $region32
        $region31: #{tpu_custom_call.1} parent=11 // pred_region
          %230 = vsyncadd [#allocation9], 0
          %s231 = sshll.u32 %s5, 4
          %s232 = int_to_ptr.hbm [resolvable:$true] %s231
          %s233 = sshll.u32 [#allocation8], 4
          %s234 = int_to_ptr.vmem [resolvable:$true] %s233
          %239 = dma.hbm_to_vmem [thread:$0]  %s232, 256, %s234, [#allocation9], 128, 128, 8
        $region32: #{tpu_custom_call.1} parent=11 // pred_fallthru
          _
      $region12: #{tpu_custom_call.1} parent=5 // pred_fallthru
        _
      %p240 = scmp.lt.s32.totalorder %s20, 2
      // Predicated region
      $region33: #{tpu_custom_call.1} parent=5 // pred_check
        %p241 = pneg %p240
      $region34: #{tpu_custom_call.1} parent=5 // pred_check_branch
        %243 = sbr.rel (%p241) target = $region36
      $region35: #{tpu_custom_call.1} parent=5 // pred_region
        // Predicated region
        $region37: #{tpu_custom_call.1} parent=35 // pred_check
          %p244 = pneg %p40
        $region38: #{tpu_custom_call.1} parent=35 // pred_check_branch
          %246 = sbr.rel (%p244) target = $region40
        $region39: #{tpu_custom_call.1} parent=35 // pred_region
          %s247 = sand.u32 %s30, 1
          %s248 = scalar_lea.sflag [#allocation3], %s247
          %s249 = sand.u32 %s30, 1
          %s250 = smul.addr %s249, 16
          %s251 = scalar_lea.vmem [#allocation2], %s250
          %253 = vsyncadd %s248, 0
          %s254 = smul.addr %s20, 2
          %s255 = smul.addr %s254, 8
          %s256 = scalar_lea.hbm %s0, %s255
          %s257 = sshll.u32 %s256, 4
          %s258 = int_to_ptr.hbm [resolvable:$true] %s257
          %s259 = sshll.u32 %s251, 4
          %s260 = int_to_ptr.vmem [resolvable:$true] %s259
          %265 = dma.hbm_to_vmem [thread:$0]  %s258, 256, %s260, %s248, 128, 128, 8
        $region40: #{tpu_custom_call.1} parent=35 // pred_fallthru
          _
      $region36: #{tpu_custom_call.1} parent=5 // pred_fallthru
        _
      %p266 = scmp.le.s32.totalorder 1, %s20
      %p267 = scmp.lt.s32.totalorder %s20, 3
      %p268 = pnand %p266, %p267
      %p269 = pneg %p268
      // Predicated region
      $region41: #{tpu_custom_call.1} parent=5 // pred_check
        _
      $region42: #{tpu_custom_call.1} parent=5 // pred_check_branch
        %271 = sbr.rel (%p268) target = $region44
      $region43: #{tpu_custom_call.1} parent=5 // pred_region
        %s272 = ssub.s32 %s20, 1
        %s273 = sand.u32 %s33, 1
        %s274 = scalar_lea.sflag [#allocation3], %s273
        %s275 = sand.u32 %s33, 1
        %s276 = smul.addr %s275, 16
        %s277 = scalar_lea.vmem [#allocation2], %s276
        // Predicated region
        $region45: #{tpu_custom_call.1} parent=43 // pred_check
          %p278 = pneg %p46
        $region46: #{tpu_custom_call.1} parent=43 // pred_check_branch
          %280 = sbr.rel (%p278) target = $region48
        $region47: #{tpu_custom_call.1} parent=43 // pred_region
          %282 = dma.done %s274, 256
        $region48: #{tpu_custom_call.1} parent=43 // pred_fallthru
          _
        // Predicated region
        $region49: #{tpu_custom_call.1} parent=43 // pred_check
          %p283 = pneg %p67
        $region50: #{tpu_custom_call.1} parent=43 // pred_check_branch
          %285 = sbr.rel (%p283) target = $region52
        $region51: #{tpu_custom_call.1} parent=43 // pred_region
          %287 = dma.done [#allocation6], 1024
        $region52: #{tpu_custom_call.1} parent=43 // pred_fallthru
          _
        // Predicated region
        $region53: #{tpu_custom_call.1} parent=43 // pred_check
          %p288 = pneg %p109
        $region54: #{tpu_custom_call.1} parent=43 // pred_check_branch
          %290 = sbr.rel (%p288) target = $region56
        $region55: #{tpu_custom_call.1} parent=43 // pred_region
          %292 = dma.done [#allocation6], 512
        $region56: #{tpu_custom_call.1} parent=43 // pred_fallthru
          _
        // Predicated region
        $region57: #{tpu_custom_call.1} parent=43 // pred_check
          %p293 = pneg %p151
        $region58: #{tpu_custom_call.1} parent=43 // pred_check_branch
          %295 = sbr.rel (%p293) target = $region60
        $region59: #{tpu_custom_call.1} parent=43 // pred_region
          %297 = dma.done [#allocation9], 256
        $region60: #{tpu_custom_call.1} parent=43 // pred_fallthru
          _
        %s298 = sand.u32 %s33, 1
        %s299 = scalar_lea.sflag [#allocation3], %s298
        %s300 = sand.u32 %s33, 1
        %s301 = smul.addr %s300, 16
        %s302 = scalar_lea.vmem [#allocation2], %s301
        %p303 = pneg %p46
        %p304 = pneg %p43
        %p305 = pneg %p67
        %p306 = pneg %p64
        %p307 = pneg %p88
        %p308 = pneg %p85
        %p309 = pneg %p109
        %p310 = pneg %p106
        %p311 = pneg %p130
        %p312 = pneg %p127
        %p313 = pneg %p151
        %p314 = pneg %p148
        %p315 = pneg %p177
        %p316 = pneg %p174
        %s317 = sand.u32 %s164, 1
        %s318 = scalar_lea.sflag [#allocation4], %s317
        %s319 = sand.u32 %s164, 1
        %s320 = smul.addr %s319, 16
        %s321 = scalar_lea.vmem [#allocation10], %s320
        %v322 = vld [vmem:[%s277] sm:$0xff]
        %v323 = vld [vmem:[%s277 + $0x8] sm:$0xff]
        %v324 = vld [vmem:[#allocation5] sm:$0xff]
        %v325 = vld [vmem:[#allocation5 + $0x8] sm:$0xff]
        %v326 = vld [vmem:[#allocation5 + $0x10] sm:$0xff]
        %v327 = vld [vmem:[#allocation5 + $0x18] sm:$0xff]
        %v328 = vld [vmem:[#allocation5 + $0x20] sm:$0xff]
        %v329 = vld [vmem:[#allocation5 + $0x28] sm:$0xff]
        %v330 = vld [vmem:[#allocation5 + $0x30] sm:$0xff]
        %v331 = vld [vmem:[#allocation5 + $0x38] sm:$0xff]
        %v332 = vld [vmem:[%s2] sm:$0x1]
        %v334 = vperm.slane %v332, 0
        %vm336 = vcmask 523264
        %v338 = vsel %vm336, %v322, 0
        %v341 = vsel %vm336, %v323, 0
        %343 = vmatpush.msra.mxu0 0.0
        %344 = vmatpush.msra.mxu0 0.0
        %345 = vmatpush.msra.mxu0 0.0
        %346 = vmatpush.msra.mxu0 0.0
        %347 = vmatpush.msra.mxu0 0.0
        %348 = vmatpush.msra.mxu0 0.0
        %349 = vmatpush.msra.mxu0 0.0
        %350 = vmatpush.msra.mxu0 0.0
        %351 = vmatpush.msra.mxu0 %v331
        %352 = vmatpush.msra.mxu0 %v330
        %353 = vmatpush.msra.mxu0 %v329
        %354 = vmatpush.msra.mxu0 %v328
        %355 = vmatpush.msra.mxu0 %v327
        %356 = vmatpush.msra.mxu0 %v326
        %357 = vmatpush.msra.mxu0 %v325
        %358 = vmatpush.msra.mxu0 %v324
        %359 = vmatmul.f32.gmra.mxu0 %v338
        %v360 = vpop.f32.mrf.mxu0
        %v361 = vadd.f32 %v334, %v360
        %362 = vmatmul.f32.gmra.mxu0 %v341
        %v363 = vpop.f32.mrf.mxu0
        %v364 = vadd.f32 %v334, %v363
        %365 = vdwg.mxu0
        %368 = vrot.lane.b32.xlu0 %v361, 120
        %v369 = vpop.permute.xlu0 %368
        %370 = vrot.lane.b32.xlu0 %v364, 120
        %v371 = vpop.permute.xlu0 %370
        %372 = vrot.lane.b32.xlu0 %v361, 112
        %v373 = vpop.permute.xlu0 %372
        %374 = vrot.lane.b32.xlu0 %v364, 112
        %v375 = vpop.permute.xlu0 %374
        %376 = vrot.lane.b32.xlu0 %v361, 104
        %v377 = vpop.permute.xlu0 %376
        %378 = vrot.lane.b32.xlu0 %v364, 104
        %v379 = vpop.permute.xlu0 %378
        %380 = vrot.lane.b32.xlu0 %v361, 96
        %v381 = vpop.permute.xlu0 %380
        %382 = vrot.lane.b32.xlu0 %v364, 96
        %v383 = vpop.permute.xlu0 %382
        %vm384 = vcmask 64512
        %v385 = vsel %vm384, %v361, 0
        %v387 = vsel %vm384, %v364, 0
        %v389 = vsel %vm384, %v381, 0
        %v391 = vsel %vm384, %v383, 0
        %393 = vmatpush.xpose.msra.mxu0 0.0
        %394 = vmatpush.xpose.msra.mxu0 0.0
        %395 = vmatpush.xpose.msra.mxu0 0.0
        %396 = vmatpush.xpose.msra.mxu0 0.0
        %397 = vmatpush.xpose.msra.mxu0 0.0
        %398 = vmatpush.xpose.msra.mxu0 0.0
        %399 = vmatpush.xpose.msra.mxu0 0.0
        %400 = vmatpush.xpose.msra.mxu0 0.0
        %401 = vmatpush.xpose.msra.mxu0 0.0
        %402 = vmatpush.xpose.msra.mxu0 0.0
        %403 = vmatpush.xpose.msra.mxu0 0.0
        %404 = vmatpush.xpose.msra.mxu0 0.0
        %405 = vmatpush.xpose.msra.mxu0 0.0
        %406 = vmatpush.xpose.msra.mxu0 0.0
        %407 = vmatpush.xpose.msra.mxu0 %v391
        %408 = vmatpush.xpose.msra.mxu0 %v389
        %409 = vmatmul.f32.gmra.mxu0 %v385
        %v410 = vpop.f32.mrf.mxu0
        %v411 = vadd.f32 0.0, %v410
        %412 = vmatmul.f32.gmra.mxu0 %v387
        %v413 = vpop.f32.mrf.mxu0
        %v414 = vadd.f32 0.0, %v413
        %415 = vdwg.mxu0
        %416 = vrot.lane.b32.xlu0 %v369, 96
        %v417 = vpop.permute.xlu0 %416
        %418 = vrot.lane.b32.xlu0 %v371, 96
        %v419 = vpop.permute.xlu0 %418
        %v420 = vsel %vm384, %v369, 0
        %v422 = vsel %vm384, %v371, 0
        %v424 = vsel %vm384, %v417, 0
        %v426 = vsel %vm384, %v419, 0
        %428 = vmatpush.xpose.msra.mxu0 0.0
        %429 = vmatpush.xpose.msra.mxu0 0.0
        %430 = vmatpush.xpose.msra.mxu0 0.0
        %431 = vmatpush.xpose.msra.mxu0 0.0
        %432 = vmatpush.xpose.msra.mxu0 0.0
        %433 = vmatpush.xpose.msra.mxu0 0.0
        %434 = vmatpush.xpose.msra.mxu0 0.0
        %435 = vmatpush.xpose.msra.mxu0 0.0
        %436 = vmatpush.xpose.msra.mxu0 0.0
        %437 = vmatpush.xpose.msra.mxu0 0.0
        %438 = vmatpush.xpose.msra.mxu0 0.0
        %439 = vmatpush.xpose.msra.mxu0 0.0
        %440 = vmatpush.xpose.msra.mxu0 0.0
        %441 = vmatpush.xpose.msra.mxu0 0.0
        %442 = vmatpush.xpose.msra.mxu0 %v426
        %443 = vmatpush.xpose.msra.mxu0 %v424
        %444 = vmatmul.f32.gmra.mxu0 %v420
        %v445 = vpop.f32.mrf.mxu0
        %v446 = vadd.f32 0.0, %v445
        %447 = vmatmul.f32.gmra.mxu0 %v422
        %v448 = vpop.f32.mrf.mxu0
        %v449 = vadd.f32 0.0, %v448
        %450 = vdwg.mxu0
        %451 = vrot.lane.b32.xlu0 %v373, 96
        %v452 = vpop.permute.xlu0 %451
        %453 = vrot.lane.b32.xlu0 %v375, 96
        %v454 = vpop.permute.xlu0 %453
        %v455 = vsel %vm384, %v373, 0
        %v457 = vsel %vm384, %v375, 0
        %v459 = vsel %vm384, %v452, 0
        %v461 = vsel %vm384, %v454, 0
        %463 = vmatpush.xpose.msra.mxu0 0.0
        %464 = vmatpush.xpose.msra.mxu0 0.0
        %465 = vmatpush.xpose.msra.mxu0 0.0
        %466 = vmatpush.xpose.msra.mxu0 0.0
        %467 = vmatpush.xpose.msra.mxu0 0.0
        %468 = vmatpush.xpose.msra.mxu0 0.0
        %469 = vmatpush.xpose.msra.mxu0 0.0
        %470 = vmatpush.xpose.msra.mxu0 0.0
        %471 = vmatpush.xpose.msra.mxu0 0.0
        %472 = vmatpush.xpose.msra.mxu0 0.0
        %473 = vmatpush.xpose.msra.mxu0 0.0
        %474 = vmatpush.xpose.msra.mxu0 0.0
        %475 = vmatpush.xpose.msra.mxu0 0.0
        %476 = vmatpush.xpose.msra.mxu0 0.0
        %477 = vmatpush.xpose.msra.mxu0 %v461
        %478 = vmatpush.xpose.msra.mxu0 %v459
        %479 = vmatmul.f32.gmra.mxu0 %v455
        %v480 = vpop.f32.mrf.mxu0
        %v481 = vadd.f32 0.0, %v480
        %482 = vmatmul.f32.gmra.mxu0 %v457
        %v483 = vpop.f32.mrf.mxu0
        %v484 = vadd.f32 0.0, %v483
        %485 = vdwg.mxu0
        %486 = vrot.lane.b32.xlu0 %v377, 96
        %v487 = vpop.permute.xlu0 %486
        %488 = vrot.lane.b32.xlu0 %v379, 96
        %v489 = vpop.permute.xlu0 %488
        %v490 = vsel %vm384, %v377, 0
        %v492 = vsel %vm384, %v379, 0
        %v494 = vsel %vm384, %v487, 0
        %v496 = vsel %vm384, %v489, 0
        %498 = vmatpush.xpose.msra.mxu0 0.0
        %499 = vmatpush.xpose.msra.mxu0 0.0
        %500 = vmatpush.xpose.msra.mxu0 0.0
        %501 = vmatpush.xpose.msra.mxu0 0.0
        %502 = vmatpush.xpose.msra.mxu0 0.0
        %503 = vmatpush.xpose.msra.mxu0 0.0
        %504 = vmatpush.xpose.msra.mxu0 0.0
        %505 = vmatpush.xpose.msra.mxu0 0.0
        %506 = vmatpush.xpose.msra.mxu0 0.0
        %507 = vmatpush.xpose.msra.mxu0 0.0
        %508 = vmatpush.xpose.msra.mxu0 0.0
        %509 = vmatpush.xpose.msra.mxu0 0.0
        %510 = vmatpush.xpose.msra.mxu0 0.0
        %511 = vmatpush.xpose.msra.mxu0 0.0
        %512 = vmatpush.xpose.msra.mxu0 %v496
        %513 = vmatpush.xpose.msra.mxu0 %v494
        %514 = vmatmul.f32.gmra.mxu0 %v490
        %v515 = vpop.f32.mrf.mxu0
        %v516 = vadd.f32 0.0, %v515
        %517 = vmatmul.f32.gmra.mxu0 %v492
        %v518 = vpop.f32.mrf.mxu0
        %v519 = vadd.f32 0.0, %v518
        %520 = vdwg.mxu0
        %v521 = vmul.f32 %v411, 0.35355338
        %v522 = vmul.f32 %v414, 0.35355338
        %v523 = vmul.f32 %v446, 0.35355338
        %v524 = vmul.f32 %v449, 0.35355338
        %v525 = vmul.f32 %v481, 0.35355338
        %v526 = vmul.f32 %v484, 0.35355338
        %v527 = vmul.f32 %v516, 0.35355338
        %v528 = vmul.f32 %v519, 0.35355338
        %v529 = vld [vmem:[#allocation8] sm:$0xff]
        %v530 = vld [vmem:[#allocation8 + $0x8] sm:$0xff]
        %v531 = vadd.f32 %v521, %v529
        %v532 = vadd.f32 %v522, %v530
        %v533 = vadd.f32 %v523, %v529
        %v534 = vadd.f32 %v524, %v530
        %v535 = vadd.f32 %v525, %v529
        %v536 = vadd.f32 %v526, %v530
        %v537 = vadd.f32 %v527, %v529
        %v538 = vadd.f32 %v528, %v530
        %vm539 = vcmask 130048
        %v540 = vsel %vm539, %v531, -inf
        %541 = vmax.xlane.f32.xlu0 %v540
        %v542 = vpop.xlane.xlu0 %541
        %v543 = vsel %vm539, %v532, -inf
        %544 = vmax.xlane.f32.xlu0 %v543
        %v545 = vpop.xlane.xlu0 %544
        %v546 = vsel %vm539, %v533, -inf
        %547 = vmax.xlane.f32.xlu0 %v546
        %v548 = vpop.xlane.xlu0 %547
        %v549 = vsel %vm539, %v534, -inf
        %550 = vmax.xlane.f32.xlu0 %v549
        %v551 = vpop.xlane.xlu0 %550
        %v552 = vsel %vm539, %v535, -inf
        %553 = vmax.xlane.f32.xlu0 %v552
        %v554 = vpop.xlane.xlu0 %553
        %v555 = vsel %vm539, %v536, -inf
        %556 = vmax.xlane.f32.xlu0 %v555
        %v557 = vpop.xlane.xlu0 %556
        %v558 = vsel %vm539, %v537, -inf
        %559 = vmax.xlane.f32.xlu0 %v558
        %v560 = vpop.xlane.xlu0 %559
        %v561 = vsel %vm539, %v538, -inf
        %562 = vmax.xlane.f32.xlu0 %v561
        %v563 = vpop.xlane.xlu0 %562
        %v564 = vsub.f32 %v531, %v542
        %v565 = vsub.f32 %v532, %v545
        %v566 = vsub.f32 %v533, %v548
        %v567 = vsub.f32 %v534, %v551
        %v568 = vsub.f32 %v535, %v554
        %v569 = vsub.f32 %v536, %v557
        %v570 = vsub.f32 %v537, %v560
        %v571 = vsub.f32 %v538, %v563
        %v572 = vmul.f32 %v564, 1.442695
        %v573 = vpow.pop %v572
        %v574 = vmul.f32 %v565, 1.442695
        %v575 = vpow.pop %v574
        %v576 = vmul.f32 %v566, 1.442695
        %v577 = vpow.pop %v576
        %v578 = vmul.f32 %v567, 1.442695
        %v579 = vpow.pop %v578
        %v580 = vmul.f32 %v568, 1.442695
        %v581 = vpow.pop %v580
        %v582 = vmul.f32 %v569, 1.442695
        %v583 = vpow.pop %v582
        %v584 = vmul.f32 %v570, 1.442695
        %v585 = vpow.pop %v584
        %v586 = vmul.f32 %v571, 1.442695
        %v587 = vpow.pop %v586
        %v588 = vsel %vm539, %v573, 0.0
        %589 = vadd.xlane.f32.xlu0 %v588
        %v590 = vpop.xlane.xlu0 %589
        %v591 = vsel %vm539, %v575, 0.0
        %592 = vadd.xlane.f32.xlu0 %v591
        %v593 = vpop.xlane.xlu0 %592
        %v594 = vsel %vm539, %v577, 0.0
        %595 = vadd.xlane.f32.xlu0 %v594
        %v596 = vpop.xlane.xlu0 %595
        %v597 = vsel %vm539, %v579, 0.0
        %598 = vadd.xlane.f32.xlu0 %v597
        %v599 = vpop.xlane.xlu0 %598
        %v600 = vsel %vm539, %v581, 0.0
        %601 = vadd.xlane.f32.xlu0 %v600
        %v602 = vpop.xlane.xlu0 %601
        %v603 = vsel %vm539, %v583, 0.0
        %604 = vadd.xlane.f32.xlu0 %v603
        %v605 = vpop.xlane.xlu0 %604
        %v606 = vsel %vm539, %v585, 0.0
        %607 = vadd.xlane.f32.xlu0 %v606
        %v608 = vpop.xlane.xlu0 %607
        %v609 = vsel %vm539, %v587, 0.0
        %610 = vadd.xlane.f32.xlu0 %v609
        %v611 = vpop.xlane.xlu0 %610
        %v612 = vrcp.pop %v590
        %v613 = vmul.f32 %v590, %v612
        %v614 = vsub.f32 1.0, %v613
        %v615 = vmul.f32 %v612, %v614
        %v616 = vadd.f32 %v612, %v615
        %vm617 = vweird.f32 %v590
        %vm618 = vweird.f32 %v612
        %vm619 = vmor %vm617, %vm618
        %v620 = vsel %vm619, %v612, %v616
        %v621 = vand.u32 2147483647, %v590
        %vm622 = vcmp.eq.f32.partialorder %v621, 8.507059e+37
        %v623 = vand.u32 %v590, 2147483648
        %v624 = vor.u32 1.1754944e-38, %v623
        %v625 = vsel %vm622, %v624, %v620
        %v626 = vmul.f32 %v573, %v625
        %v627 = vrcp.pop %v593
        %v628 = vmul.f32 %v593, %v627
        %v629 = vsub.f32 1.0, %v628
        %v630 = vmul.f32 %v627, %v629
        %v631 = vadd.f32 %v627, %v630
        %vm632 = vweird.f32 %v593
        %vm633 = vweird.f32 %v627
        %vm634 = vmor %vm632, %vm633
        %v635 = vsel %vm634, %v627, %v631
        %v636 = vand.u32 2147483647, %v593
        %vm637 = vcmp.eq.f32.partialorder %v636, 8.507059e+37
        %v638 = vand.u32 %v593, 2147483648
        %v639 = vor.u32 1.1754944e-38, %v638
        %v640 = vsel %vm637, %v639, %v635
        %v641 = vmul.f32 %v575, %v640
        %v642 = vrcp.pop %v596
        %v643 = vmul.f32 %v596, %v642
        %v644 = vsub.f32 1.0, %v643
        %v645 = vmul.f32 %v642, %v644
        %v646 = vadd.f32 %v642, %v645
        %vm647 = vweird.f32 %v596
        %vm648 = vweird.f32 %v642
        %vm649 = vmor %vm647, %vm648
        %v650 = vsel %vm649, %v642, %v646
        %v651 = vand.u32 2147483647, %v596
        %vm652 = vcmp.eq.f32.partialorder %v651, 8.507059e+37
        %v653 = vand.u32 %v596, 2147483648
        %v654 = vor.u32 1.1754944e-38, %v653
        %v655 = vsel %vm652, %v654, %v650
        %v656 = vmul.f32 %v577, %v655
        %v657 = vrcp.pop %v599
        %v658 = vmul.f32 %v599, %v657
        %v659 = vsub.f32 1.0, %v658
        %v660 = vmul.f32 %v657, %v659
        %v661 = vadd.f32 %v657, %v660
        %vm662 = vweird.f32 %v599
        %vm663 = vweird.f32 %v657
        %vm664 = vmor %vm662, %vm663
        %v665 = vsel %vm664, %v657, %v661
        %v666 = vand.u32 2147483647, %v599
        %vm667 = vcmp.eq.f32.partialorder %v666, 8.507059e+37
        %v668 = vand.u32 %v599, 2147483648
        %v669 = vor.u32 1.1754944e-38, %v668
        %v670 = vsel %vm667, %v669, %v665
        %v671 = vmul.f32 %v579, %v670
        %v672 = vrcp.pop %v602
        %v673 = vmul.f32 %v602, %v672
        %v674 = vsub.f32 1.0, %v673
        %v675 = vmul.f32 %v672, %v674
        %v676 = vadd.f32 %v672, %v675
        %vm677 = vweird.f32 %v602
        %vm678 = vweird.f32 %v672
        %vm679 = vmor %vm677, %vm678
        %v680 = vsel %vm679, %v672, %v676
        %v681 = vand.u32 2147483647, %v602
        %vm682 = vcmp.eq.f32.partialorder %v681, 8.507059e+37
        %v683 = vand.u32 %v602, 2147483648
        %v684 = vor.u32 1.1754944e-38, %v683
        %v685 = vsel %vm682, %v684, %v680
        %v686 = vmul.f32 %v581, %v685
        %v687 = vrcp.pop %v605
        %v688 = vmul.f32 %v605, %v687
        %v689 = vsub.f32 1.0, %v688
        %v690 = vmul.f32 %v687, %v689
        %v691 = vadd.f32 %v687, %v690
        %vm692 = vweird.f32 %v605
        %vm693 = vweird.f32 %v687
        %vm694 = vmor %vm692, %vm693
        %v695 = vsel %vm694, %v687, %v691
        %v696 = vand.u32 2147483647, %v605
        %vm697 = vcmp.eq.f32.partialorder %v696, 8.507059e+37
        %v698 = vand.u32 %v605, 2147483648
        %v699 = vor.u32 1.1754944e-38, %v698
        %v700 = vsel %vm697, %v699, %v695
        %v701 = vmul.f32 %v583, %v700
        %v702 = vrcp.pop %v608
        %v703 = vmul.f32 %v608, %v702
        %v704 = vsub.f32 1.0, %v703
        %v705 = vmul.f32 %v702, %v704
        %v706 = vadd.f32 %v702, %v705
        %vm707 = vweird.f32 %v608
        %vm708 = vweird.f32 %v702
        %vm709 = vmor %vm707, %vm708
        %v710 = vsel %vm709, %v702, %v706
        %v711 = vand.u32 2147483647, %v608
        %vm712 = vcmp.eq.f32.partialorder %v711, 8.507059e+37
        %v713 = vand.u32 %v608, 2147483648
        %v714 = vor.u32 1.1754944e-38, %v713
        %v715 = vsel %vm712, %v714, %v710
        %v716 = vmul.f32 %v585, %v715
        %v717 = vrcp.pop %v611
        %v718 = vmul.f32 %v611, %v717
        %v719 = vsub.f32 1.0, %v718
        %v720 = vmul.f32 %v717, %v719
        %v721 = vadd.f32 %v717, %v720
        %vm722 = vweird.f32 %v611
        %vm723 = vweird.f32 %v717
        %vm724 = vmor %vm722, %vm723
        %v725 = vsel %vm724, %v717, %v721
        %v726 = vand.u32 2147483647, %v611
        %vm727 = vcmp.eq.f32.partialorder %v726, 8.507059e+37
        %v728 = vand.u32 %v611, 2147483648
        %v729 = vor.u32 1.1754944e-38, %v728
        %v730 = vsel %vm727, %v729, %v725
        %v731 = vmul.f32 %v587, %v730
        %732 = vrot.lane.b32.xlu0 %v361, 64
        %v733 = vpop.permute.xlu0 %732
        %734 = vrot.lane.b32.xlu0 %v364, 64
        %v735 = vpop.permute.xlu0 %734
        %v739 = vsel %vm539, %v626, 0
        %v742 = vsel %vm539, %v641, 0
        %744 = vmatpush.msra.mxu0 0.0
        %745 = vmatpush.msra.mxu0 0.0
        %746 = vmatpush.msra.mxu0 0.0
        %747 = vmatpush.msra.mxu0 0.0
        %748 = vmatpush.msra.mxu0 0.0
        %749 = vmatpush.msra.mxu0 0.0
        %750 = vmatpush.msra.mxu0 0.0
        %751 = vmatpush.msra.mxu0 0.0
        %752 = vmatpush.msra.mxu0 0.0
        %753 = vmatpush.msra.mxu0 0.0
        %754 = vmatpush.msra.mxu0 0.0
        %755 = vmatpush.msra.mxu0 0.0
        %756 = vmatpush.msra.mxu0 0.0
        %757 = vmatpush.msra.mxu0 0.0
        %758 = vmatpush.msra.mxu0 %v735
        %759 = vmatpush.msra.mxu0 %v733
        %760 = vmatmul.f32.gmra.mxu0 %v739
        %v761 = vpop.f32.mrf.mxu0
        %v762 = vadd.f32 0.0, %v761
        %763 = vmatmul.f32.gmra.mxu0 %v742
        %v764 = vpop.f32.mrf.mxu0
        %v765 = vadd.f32 0.0, %v764
        %766 = vdwg.mxu0
        %767 = vrot.lane.b32.xlu0 %v369, 64
        %v768 = vpop.permute.xlu0 %767
        %769 = vrot.lane.b32.xlu0 %v371, 64
        %v770 = vpop.permute.xlu0 %769
        %v774 = vsel %vm539, %v656, 0
        %v777 = vsel %vm539, %v671, 0
        %779 = vmatpush.msra.mxu0 0.0
        %780 = vmatpush.msra.mxu0 0.0
        %781 = vmatpush.msra.mxu0 0.0
        %782 = vmatpush.msra.mxu0 0.0
        %783 = vmatpush.msra.mxu0 0.0
        %784 = vmatpush.msra.mxu0 0.0
        %785 = vmatpush.msra.mxu0 0.0
        %786 = vmatpush.msra.mxu0 0.0
        %787 = vmatpush.msra.mxu0 0.0
        %788 = vmatpush.msra.mxu0 0.0
        %789 = vmatpush.msra.mxu0 0.0
        %790 = vmatpush.msra.mxu0 0.0
        %791 = vmatpush.msra.mxu0 0.0
        %792 = vmatpush.msra.mxu0 0.0
        %793 = vmatpush.msra.mxu0 %v770
        %794 = vmatpush.msra.mxu0 %v768
        %795 = vmatmul.f32.gmra.mxu0 %v774
        %v796 = vpop.f32.mrf.mxu0
        %v797 = vadd.f32 0.0, %v796
        %798 = vmatmul.f32.gmra.mxu0 %v777
        %v799 = vpop.f32.mrf.mxu0
        %v800 = vadd.f32 0.0, %v799
        %801 = vdwg.mxu0
        %802 = vrot.lane.b32.xlu0 %v373, 64
        %v803 = vpop.permute.xlu0 %802
        %804 = vrot.lane.b32.xlu0 %v375, 64
        %v805 = vpop.permute.xlu0 %804
        %v809 = vsel %vm539, %v686, 0
        %v812 = vsel %vm539, %v701, 0
        %814 = vmatpush.msra.mxu0 0.0
        %815 = vmatpush.msra.mxu0 0.0
        %816 = vmatpush.msra.mxu0 0.0
        %817 = vmatpush.msra.mxu0 0.0
        %818 = vmatpush.msra.mxu0 0.0
        %819 = vmatpush.msra.mxu0 0.0
        %820 = vmatpush.msra.mxu0 0.0
        %821 = vmatpush.msra.mxu0 0.0
        %822 = vmatpush.msra.mxu0 0.0
        %823 = vmatpush.msra.mxu0 0.0
        %824 = vmatpush.msra.mxu0 0.0
        %825 = vmatpush.msra.mxu0 0.0
        %826 = vmatpush.msra.mxu0 0.0
        %827 = vmatpush.msra.mxu0 0.0
        %828 = vmatpush.msra.mxu0 %v805
        %829 = vmatpush.msra.mxu0 %v803
        %830 = vmatmul.f32.gmra.mxu0 %v809
        %v831 = vpop.f32.mrf.mxu0
        %v832 = vadd.f32 0.0, %v831
        %833 = vmatmul.f32.gmra.mxu0 %v812
        %v834 = vpop.f32.mrf.mxu0
        %v835 = vadd.f32 0.0, %v834
        %836 = vdwg.mxu0
        %837 = vrot.lane.b32.xlu0 %v377, 64
        %v838 = vpop.permute.xlu0 %837
        %839 = vrot.lane.b32.xlu0 %v379, 64
        %v840 = vpop.permute.xlu0 %839
        %v844 = vsel %vm539, %v716, 0
        %v847 = vsel %vm539, %v731, 0
        %849 = vmatpush.msra.mxu0 0.0
        %850 = vmatpush.msra.mxu0 0.0
        %851 = vmatpush.msra.mxu0 0.0
        %852 = vmatpush.msra.mxu0 0.0
        %853 = vmatpush.msra.mxu0 0.0
        %854 = vmatpush.msra.mxu0 0.0
        %855 = vmatpush.msra.mxu0 0.0
        %856 = vmatpush.msra.mxu0 0.0
        %857 = vmatpush.msra.mxu0 0.0
        %858 = vmatpush.msra.mxu0 0.0
        %859 = vmatpush.msra.mxu0 0.0
        %860 = vmatpush.msra.mxu0 0.0
        %861 = vmatpush.msra.mxu0 0.0
        %862 = vmatpush.msra.mxu0 0.0
        %863 = vmatpush.msra.mxu0 %v840
        %864 = vmatpush.msra.mxu0 %v838
        %865 = vmatmul.f32.gmra.mxu0 %v844
        %v866 = vpop.f32.mrf.mxu0
        %v867 = vadd.f32 0.0, %v866
        %868 = vmatmul.f32.gmra.mxu0 %v847
        %v869 = vpop.f32.mrf.mxu0
        %v870 = vadd.f32 0.0, %v869
        %871 = vdwg.mxu0
        %874 = vrot.lane.b32.xlu0 %v797, 8
        %v875 = vpop.permute.xlu0 %874
        %876 = vrot.lane.b32.xlu0 %v800, 8
        %v877 = vpop.permute.xlu0 %876
        %882 = vrot.lane.b32.xlu0 %v832, 16
        %v883 = vpop.permute.xlu0 %882
        %884 = vrot.lane.b32.xlu0 %v835, 16
        %v885 = vpop.permute.xlu0 %884
        %890 = vrot.lane.b32.xlu0 %v867, 24
        %v891 = vpop.permute.xlu0 %890
        %892 = vrot.lane.b32.xlu0 %v870, 24
        %v893 = vpop.permute.xlu0 %892
        %v896 = vsel %vm384, %v762, %v875
        %v897 = vsel %vm384, %v765, %v877
        %v898 = vsel %vm539, %v896, %v883
        %v899 = vsel %vm539, %v897, %v885
        %vm900 = vcmask 195584
        %v901 = vsel %vm900, %v898, %v891
        %v902 = vsel %vm900, %v899, %v893
        %v903 = vld [vmem:[#allocation7] sm:$0xff]
        %v904 = vld [vmem:[#allocation7 + $0x8] sm:$0xff]
        %v905 = vld [vmem:[#allocation7 + $0x10] sm:$0xff]
        %v906 = vld [vmem:[#allocation7 + $0x18] sm:$0xff]
        %v907 = vld [vmem:[%s4] sm:$0x1]
        %v909 = vperm.slane %v907, 0
        %vm911 = vcmask 261120
        %v913 = vsel %vm911, %v901, 0
        %v916 = vsel %vm911, %v902, 0
        %918 = vmatpush.msra.mxu0 0.0
        %919 = vmatpush.msra.mxu0 0.0
        %920 = vmatpush.msra.mxu0 0.0
        %921 = vmatpush.msra.mxu0 0.0
        %922 = vmatpush.msra.mxu0 0.0
        %923 = vmatpush.msra.mxu0 0.0
        %924 = vmatpush.msra.mxu0 0.0
        %925 = vmatpush.msra.mxu0 0.0
        %926 = vmatpush.msra.mxu0 0.0
        %927 = vmatpush.msra.mxu0 0.0
        %928 = vmatpush.msra.mxu0 0.0
        %929 = vmatpush.msra.mxu0 0.0
        %930 = vmatpush.msra.mxu0 %v906
        %931 = vmatpush.msra.mxu0 %v905
        %932 = vmatpush.msra.mxu0 %v904
        %933 = vmatpush.msra.mxu0 %v903
        %934 = vmatmul.f32.gmra.mxu0 %v913
        %v935 = vpop.f32.mrf.mxu0
        %v936 = vadd.f32 %v909, %v935
        %937 = vmatmul.f32.gmra.mxu0 %v916
        %v938 = vpop.f32.mrf.mxu0
        %v939 = vadd.f32 %v909, %v938
        %940 = vdwg.mxu0
        %941 = vst.msk [vmem:[%s321] sm:$0xff] %vm336, %v936
        %942 = vst.msk [vmem:[%s321 + $0x8] sm:$0xff] %vm336, %v939
        %s943 = sand.u32 %s164, 1
        %s944 = scalar_lea.sflag [#allocation4], %s943
        %s945 = sand.u32 %s164, 1
        %s946 = smul.addr %s945, 16
        %s947 = scalar_lea.vmem [#allocation10], %s946
        // Predicated region
        $region61: #{tpu_custom_call.1} parent=43 // pred_check
          %p948 = pneg %p174
        $region62: #{tpu_custom_call.1} parent=43 // pred_check_branch
          %950 = sbr.rel (%p948) target = $region64
        $region63: #{tpu_custom_call.1} parent=43 // pred_region
          %952 = vsyncadd %s944, 0
          %s953 = smul.addr %s25, 2
          %s954 = smul.addr %s953, 8
          %s955 = scalar_lea.hbm %s6, %s954
          %s956 = sshll.u32 %s947, 4
          %s957 = int_to_ptr.vmem [resolvable:$true] %s956
          %s958 = sshll.u32 %s955, 4
          %s959 = int_to_ptr.hbm [resolvable:$true] %s958
          %964 = dma.vmem_to_hbm [thread:$0]  %s957, 256, %s959, %s944, 128, 128, 8
        $region64: #{tpu_custom_call.1} parent=43 // pred_fallthru
          _
      $region44: #{tpu_custom_call.1} parent=5 // pred_fallthru
        _
      %p965 = scmp.le.s32.totalorder 2, %s20
      // Predicated region
      $region65: #{tpu_custom_call.1} parent=5 // pred_check
        %p966 = pneg %p965
      $region66: #{tpu_custom_call.1} parent=5 // pred_check_branch
        %968 = sbr.rel (%p966) target = $region68
      $region67: #{tpu_custom_call.1} parent=5 // pred_region
        %s969 = ssub.s32 %s20, 2
        // Predicated region
        $region69: #{tpu_custom_call.1} parent=67 // pred_check
          %p970 = pneg %p180
        $region70: #{tpu_custom_call.1} parent=67 // pred_check_branch
          %972 = sbr.rel (%p970) target = $region72
        $region71: #{tpu_custom_call.1} parent=67 // pred_region
          %s973 = sand.u32 %s165, 1
          %s974 = scalar_lea.sflag [#allocation4], %s973
          %s975 = sand.u32 %s165, 1
          %s976 = smul.addr %s975, 16
          %s977 = scalar_lea.vmem [#allocation10], %s976
          %979 = dma.done %s974, 256
        $region72: #{tpu_custom_call.1} parent=67 // pred_fallthru
          _
      $region68: #{tpu_custom_call.1} parent=5 // pred_fallthru
        _
    $region6: #{tpu_custom_call.1} parent=1 // loop_footer
      %s24 = sadd.s32 1, %s20
    $region7: #{tpu_custom_call.1} parent=1 // loop_footer_branch
      %19 = sbr.rel target = $region3
    $region8: #{tpu_custom_call.1} parent=1 // loop_exit
      _
    %980 = vsyncpa [#allocation3], 1
    %s981 = scalar_lea.sflag [#allocation3], 1
    %982 = vsyncpa %s981, 1
    %983 = vsyncpa [#allocation6], 1
    %984 = vsyncpa [#allocation9], 1
    %985 = vsyncpa [#allocation4], 1
    %s986 = scalar_lea.sflag [#allocation4], 1
    %987 = vsyncpa %s986, 1

</llo_original>
